<compile_context>
chip_gen: v5e
topology: v5e:2x2
jax: 0.10.0
libtpu: 0.0.40
codegen_flags: <defaults>
</compile_context>

<pallas_src>
import jax
import jax.numpy as jnp
from jax.experimental import pallas as pl
from jax.experimental.pallas import tpu as pltpu

# Config values (config.DATASET.FEATURE_DIM / config.DATASET.CLF_DIM), small demo sizes.
FEATURE_DIM = 32
CLF_DIM = 16

_SUBLANE = 8      # batch-tile granularity (sublane)
_MAX_TB = 8192    # max batch-tile rows: f32 x+out tiles double-buffered ~= 3 MiB


def _cdiv(a: int, b: int) -> int:
    return (a + b - 1) // b


def _round_up(n: int, m: int) -> int:
    return _cdiv(n, m) * m


def _choose_tile(B: int) -> tuple[int, int]:
    """Pick (TB, grid_len): TB multiple of 8, <= _MAX_TB; even grid when > 1 tile."""
    TB = _round_up(B, _SUBLANE)
    if TB <= _MAX_TB:
        return TB, 1
    # Multi-tile: force an even number of tiles so the 'parallel' batch axis
    # splits evenly across the two TensorCores on v7x.
    n = _cdiv(B, _MAX_TB)
    if n % 2:
        n += 1
    TB = _round_up(_cdiv(B, n), _SUBLANE)
    return TB, _cdiv(B, TB)


def _linear_kernel(x_ref, wt_ref, b_ref, o_ref):
    # x_ref: (TB, F), wt_ref: (F, C), b_ref: (1, C), o_ref: (TB, C)
    acc = jnp.dot(x_ref[...], wt_ref[...], preferred_element_type=jnp.float32)
    o_ref[...] = (acc + b_ref[...]).astype(o_ref.dtype)


@jax.jit
def clf_head_forward(x, weight, bias):
    """x: (B, FEATURE_DIM); weight: (CLF_DIM, FEATURE_DIM); bias: (CLF_DIM,)."""
    B, F = x.shape
    C = weight.shape[0]

    # Layout glue (fused under jit): weight transposed to (F, C), bias as (1, C).
    wt = weight.T
    b2 = bias.reshape(1, C)

    TB, grid_len = _choose_tile(B)

    cost = pl.CostEstimate(
        flops=2 * B * F * C,
        transcendentals=0,
        bytes_accessed=4 * (B * F + F * C + C + B * C),
    )

    out = pl.pallas_call(
        _linear_kernel,
        out_shape=jax.ShapeDtypeStruct((B, C), x.dtype),
        grid_spec=pltpu.PrefetchScalarGridSpec(
            num_scalar_prefetch=0,
            grid=(grid_len,),
            in_specs=[
                pl.BlockSpec((TB, F), lambda i: (i, 0)),   # x: streamed over batch
                pl.BlockSpec((F, C), lambda i: (0, 0)),    # weight: VMEM-resident
                pl.BlockSpec((1, C), lambda i: (0, 0)),    # bias:   VMEM-resident
            ],
            out_specs=pl.BlockSpec((TB, C), lambda i: (i, 0)),
        ),
        compiler_params=pltpu.CompilerParams(
            dimension_semantics=("parallel",),             # batch axis -> both TCs on v7x
        ),
        cost_estimate=cost,
    )(x, wt, b2)

    return out


if __name__ == "__main__":
    key = jax.random.PRNGKey(0)
    kx, kw, kb = jax.random.split(key, 3)

    # Deterministic parameter init (mimics nn.Linear's uniform(-1/sqrt(F), 1/sqrt(F)))
    bound = 1.0 / (FEATURE_DIM ** 0.5)
    weight = jax.random.uniform(
        kw, (CLF_DIM, FEATURE_DIM), dtype=jnp.float32, minval=-bound, maxval=bound
    )
    bias = jax.random.uniform(
        kb, (CLF_DIM,), dtype=jnp.float32, minval=-bound, maxval=bound
    )

    # Small batch (single tile, exact multiple of 8).
    B = 8
    x = jax.random.normal(kx, (B, FEATURE_DIM), dtype=jnp.float32)
    out = jax.block_until_ready(clf_head_forward(x, weight, bias))
    ref = x @ weight.T + bias
    assert out.shape == (B, CLF_DIM)
    assert jnp.allclose(out, ref, atol=1e-5, rtol=1e-5), "mismatch vs reference"

    # Non-multiple batch: single ragged tile (OOB reads padded, OOB writes masked).
    B2 = 2500
    x2 = jax.random.normal(kx, (B2, FEATURE_DIM), dtype=jnp.float32)
    out2 = jax.block_until_ready(clf_head_forward(x2, weight, bias))
    ref2 = x2 @ weight.T + bias
    assert out2.shape == (B2, CLF_DIM)
    assert jnp.allclose(out2, ref2, atol=1e-5, rtol=1e-5), "mismatch vs reference (ragged)"

    # Large batch: multi-tile grid (even number of tiles, ragged tail).
    B3 = 20000
    x3 = jax.random.normal(kx, (B3, FEATURE_DIM), dtype=jnp.float32)
    out3 = jax.block_until_ready(clf_head_forward(x3, weight, bias))
    ref3 = x3 @ weight.T + bias
    assert out3.shape == (B3, CLF_DIM)
    assert jnp.allclose(out3, ref3, atol=1e-5, rtol=1e-5), "mismatch vs reference (tiled)"

    print("KERNEL_OK")
</pallas_src>

<mosaic_0001>
module attributes {stable_mosaic.version = 11 : i64} {
  func.func @_linear_kernel(%arg0: i32, %arg1: memref<8x32xf32, #tpu.memory_space<vmem>>, %arg2: memref<32x16xf32, #tpu.memory_space<vmem>>, %arg3: memref<1x16xf32, #tpu.memory_space<vmem>>, %arg4: memref<8x16xf32, #tpu.memory_space<vmem>>) attributes {dimension_semantics = [#tpu.dimension_semantics<parallel>], iteration_bounds = array<i64: 1>, scalar_prefetch = 0 : i64, scratch_operands = 0 : i64, tpu.core_type = #tpu.core_type<tc>, window_params = [{transform_indices = @transform_0, window_bounds = array<i64: 8, 32>}, {pipeline_mode = #tpu.pipeline_mode<synchronous>, transform_indices = @transform_1, window_bounds = array<i64: 32, 16>}, {pipeline_mode = #tpu.pipeline_mode<synchronous>, transform_indices = @transform_2, window_bounds = array<i64: 1, 16>}, {transform_indices = @transform_3, window_bounds = array<i64: 8, 16>}]} {
    %c0 = arith.constant 0 : index
    %c0_0 = arith.constant 0 : index
    %0 = vector.load %arg1[%c0, %c0_0] : memref<8x32xf32, #tpu.memory_space<vmem>>, vector<8x32xf32>
    %c0_1 = arith.constant 0 : index
    %c0_2 = arith.constant 0 : index
    %1 = vector.load %arg2[%c0_1, %c0_2] : memref<32x16xf32, #tpu.memory_space<vmem>>, vector<32x16xf32>
    %cst = arith.constant dense<0.000000e+00> : vector<8x16xf32>
    %2 = tpu.matmul %0, %1, %cst {dimension_numbers = #tpu.dot_dimension_numbers<[1], [0], [0], [1], [0, 0, 1, 1], [], []>} : vector<8x32xf32>, vector<32x16xf32>, vector<8x16xf32> -> vector<8x16xf32>
    %c0_3 = arith.constant 0 : index
    %c0_4 = arith.constant 0 : index
    %3 = vector.load %arg3[%c0_3, %c0_4] : memref<1x16xf32, #tpu.memory_space<vmem>>, vector<1x16xf32>
    %4 = vector.broadcast %3 : vector<1x16xf32> to vector<8x16xf32>
    %5 = arith.addf %2, %4 : vector<8x16xf32>
    %c0_5 = arith.constant 0 : index
    %c0_6 = arith.constant 0 : index
    %6 = vector.load %arg4[%c0_5, %c0_6] : memref<8x16xf32, #tpu.memory_space<vmem>>, vector<8x16xf32>
    tpu.vector_store %arg4[%c0_5, %c0_6], %5 {strides = array<i32>} : memref<8x16xf32, #tpu.memory_space<vmem>>, vector<8x16xf32>,
    return
  }
  func.func @transform_0(%arg0: i32) -> (i32, i32) {
    %c0_i32 = arith.constant 0 : i32
    %c0_i32_0 = arith.constant 0 : i32
    return %arg0, %c0_i32 : i32, i32
  }
  func.func @transform_1(%arg0: i32) -> (i32, i32) {
    %c0_i32 = arith.constant 0 : i32
    %c0_i32_0 = arith.constant 0 : i32
    %c0_i32_1 = arith.constant 0 : i32
    return %c0_i32, %c0_i32_0 : i32, i32
  }
  func.func @transform_2(%arg0: i32) -> (i32, i32) {
    %c0_i32 = arith.constant 0 : i32
    %c0_i32_0 = arith.constant 0 : i32
    %c0_i32_1 = arith.constant 0 : i32
    return %c0_i32, %c0_i32_0 : i32, i32
  }
  func.func @transform_3(%arg0: i32) -> (i32, i32) {
    %c0_i32 = arith.constant 0 : i32
    %c0_i32_0 = arith.constant 0 : i32
    return %arg0, %c0_i32 : i32, i32
  }
}

</mosaic_0001>

<llo_original>
// kernel: clf_head_forward.1
$region0: #{clf_head_forward.1}
  #allocation0 [shape = 'u32[]', space=smem, size = 0x4, offset = 0x4, fixed_abs, tag = 'smem constant byte address 0x4 - core index']
  #allocation1 [shape = 'u32[72,128]{1,0:T(1,128)}', space=vmem, size = 0x9000, scoped, tag = 'internal scratch']
  %s0 = inlined_call_operand.vmem [shape: f32[8,32], index: 0, kind: input, shape index: {}]
  %s1 = inlined_call_operand.vmem [shape: f32[32,16], index: 1, kind: input, shape index: {}]
  %s2 = inlined_call_operand.vmem [shape: f32[1,16], index: 2, kind: input, shape index: {}]
  %s3 = inlined_call_operand.hbm [shape: f32[8,16], index: 3, kind: output, shape index: {}]
  %s4 = sld [smem:[#allocation0]]
  $region22: #{clf_head_forward.1} parent=0
    _
  %s6 = ssub.s32 1, %s4
  %s7 = scalar_select 0, %s6, %s4
  $region1: #{clf_head_forward.1} parent=0
    #allocation2 [shape = 'u8[4096]{0}', space=vmem, size = 0x1000, scoped, tag = 'output window, operand 0, single buffered']
    #allocation3 [shape = 's32[1]{0}', space=sflag, size = 0x4, scoped, tag = 'scoped memory for clf_head_forward.1']
    %8 = vsyncpa [#allocation3], 0
    // Predicated region
    $region2: #{clf_head_forward.1} parent=1 // pred_check
      _
    $region3: #{clf_head_forward.1} parent=1 // pred_check_branch
      %10 = sbr.rel (0) target = $region5
    $region4: #{clf_head_forward.1} parent=1 // pred_region
      _
    $region5: #{clf_head_forward.1} parent=1 // pred_fallthru
      _
    // Predicated region
    $region6: #{clf_head_forward.1} parent=1 // pred_check
      _
    $region7: #{clf_head_forward.1} parent=1 // pred_check_branch
      %12 = sbr.rel (0) target = $region9
    $region8: #{clf_head_forward.1} parent=1 // pred_region
      _
    $region9: #{clf_head_forward.1} parent=1 // pred_fallthru
      _
    // Predicated region
    $region10: #{clf_head_forward.1} parent=1 // pred_check
      _
    $region11: #{clf_head_forward.1} parent=1 // pred_check_branch
      %14 = sbr.rel (0) target = $region13
    $region12: #{clf_head_forward.1} parent=1 // pred_region
      _
    $region13: #{clf_head_forward.1} parent=1 // pred_fallthru
      _
    %v15 = vld [vmem:[%s0] sm:$0xff]
    %v16 = vld [vmem:[%s1] sm:$0xff]
    %v17 = vld [vmem:[%s1 + $0x8] sm:$0xff]
    %v18 = vld [vmem:[%s1 + $0x10] sm:$0xff]
    %v19 = vld [vmem:[%s1 + $0x18] sm:$0xff]
    %v20 = vld [vmem:[%s2] sm:$0x1]
    %v22 = vperm.slane %v20, 0
    %vm24 = vcmask 261120
    %v26 = vsel %vm24, %v15, 0
    %28 = vmatpush.msra.mxu0 0.0
    %29 = vmatpush.msra.mxu0 0.0
    %30 = vmatpush.msra.mxu0 0.0
    %31 = vmatpush.msra.mxu0 0.0
    %32 = vmatpush.msra.mxu0 0.0
    %33 = vmatpush.msra.mxu0 0.0
    %34 = vmatpush.msra.mxu0 0.0
    %35 = vmatpush.msra.mxu0 0.0
    %36 = vmatpush.msra.mxu0 0.0
    %37 = vmatpush.msra.mxu0 0.0
    %38 = vmatpush.msra.mxu0 0.0
    %39 = vmatpush.msra.mxu0 0.0
    %40 = vmatpush.msra.mxu0 %v19
    %41 = vmatpush.msra.mxu0 %v18
    %42 = vmatpush.msra.mxu0 %v17
    %43 = vmatpush.msra.mxu0 %v16
    %44 = vmatmul.f32.gmra.mxu0 %v26
    %v45 = vpop.f32.mrf.mxu0
    %v46 = vadd.f32 %v22, %v45
    %47 = vdwg.mxu0
    %vm48 = vcmask 130048
    %49 = vst.msk [vmem:[#allocation2] sm:$0xff] %vm48, %v46
    // Predicated region
    $region14: #{clf_head_forward.1} parent=1 // pred_check
      _
    $region15: #{clf_head_forward.1} parent=1 // pred_check_branch
      %51 = sbr.rel (0) target = $region17
    $region16: #{clf_head_forward.1} parent=1 // pred_region
      %53 = vsyncadd [#allocation3], 0
      %s55 = sshll.u32 [#allocation2], 4
      %s56 = int_to_ptr.vmem [resolvable:$true] %s55
      %s57 = sshll.u32 %s3, 4
      %s58 = int_to_ptr.hbm [resolvable:$true] %s57
      %60 = dma.vmem_to_hbm [thread:$0]  %s56, 128, %s58, [#allocation3]
    $region17: #{clf_head_forward.1} parent=1 // pred_fallthru
      _
    // Predicated region
    $region18: #{clf_head_forward.1} parent=1 // pred_check
      _
    $region19: #{clf_head_forward.1} parent=1 // pred_check_branch
      %62 = sbr.rel (0) target = $region21
    $region20: #{clf_head_forward.1} parent=1 // pred_region
      %64 = dma.done [#allocation3], 128
    $region21: #{clf_head_forward.1} parent=1 // pred_fallthru
      _
    %65 = vsyncpa [#allocation3], 1

</llo_original>
